<compile_context>
chip_gen: v7x
topology: tpu7x:2x2x1
jax: 0.10.0
libtpu: 0.0.40
codegen_flags: <defaults>
</compile_context>

<pallas_src>
import functools

import jax
import jax.numpy as jnp
from jax.experimental import pallas as pl
from jax.experimental.pallas import tpu as pltpu


def _conv_im2col_kernel(x_ref, xh_ref, w_ref, o_ref, col_ref, *, K, Wp, apply_relu):
    """One grid step: in-kernel im2col into VMEM scratch + one MXU matmul.

    x_ref  : (Cin, tq)        main flattened-input tile
    xh_ref : (Cin, th)        halo tile (the next th flat columns)
    w_ref  : (Cout, K*K*Cin)  VMEM-resident flattened weight
    o_ref  : (Cout, tq)       lane-dense output tile
    col_ref: (K*K*Cin, tq)    im2col scratch
    """
    Cin, tq = x_ref.shape
    # K*K static shifted stores; no concat of main+halo tiles.
    for kh in range(K):
        for kw in range(K):
            shift = kh * Wp + kw                 # static Python int, < th <= tq
            r0 = (kh * K + kw) * Cin
            if shift == 0:
                col_ref[r0:r0 + Cin, :] = x_ref[...]
            else:
                col_ref[r0:r0 + Cin, :tq - shift] = x_ref[:, shift:]
                col_ref[r0:r0 + Cin, tq - shift:] = xh_ref[:, :shift]
    # Single well-shaped matmul: (Cout, K*K*Cin) @ (K*K*Cin, tq) -> (Cout, tq).
    y = jnp.dot(w_ref[...], col_ref[...], preferred_element_type=jnp.float32)
    if apply_relu:
        y = jnp.maximum(y, 0.0)                  # ReLU on the f32 result
    o_ref[...] = y.astype(o_ref.dtype)


def _round_up(a, m):
    return ((a + m - 1) // m) * m


def basic_conv(x_nchw, weight, *, stride=1, relu=True, compute_dtype=None,
               q_tile_target=4096):
    """Forward pass of BasicConv (default config: bias=False, norm=False,
    relu=True, transpose=False).

    x_nchw : (N, Cin, H, W)     -- PyTorch NCHW convention
    weight : (Cout, Cin, K, K)  -- PyTorch Conv2d weight convention
    compute_dtype : optional (e.g. jnp.bfloat16) matmul-operand dtype; the cast
        is fused into the transpose/flatten glue copy, accumulation stays f32.
    """
    N, Cin, H, W = x_nchw.shape
    Cout, Cin_w, K, K2 = weight.shape
    assert Cin_w == Cin and K == K2
    pad = K // 2
    assert H > pad and W > pad, "reflect padding requires H, W > kernel_size//2"

    out_dtype = x_nchw.dtype

    # ---- host glue: reflect pad; optional cast fused into the flatten copy ----
    xp = x_nchw
    if pad > 0:
        xp = jnp.pad(xp, ((0, 0), (0, 0), (pad, pad), (pad, pad)), mode="reflect")
    if compute_dtype is not None and jnp.dtype(compute_dtype) != xp.dtype:
        xp = xp.astype(compute_dtype)            # fuses into the transpose below
        weight = weight.astype(compute_dtype)
    Hp, Wp = int(xp.shape[2]), int(xp.shape[3])
    OH = (Hp - K) // stride + 1
    OW = (Wp - K) // stride + 1

    Q = N * Hp * Wp
    xf = jnp.transpose(xp, (1, 0, 2, 3)).reshape(Cin, Q)

    # Weight: (Cout, Cin, K, K) -> (Cout, K, K, Cin) -> (Cout, K*K*Cin) so that
    # flat column (kh*K + kw)*Cin + ci matches the im2col row order above.
    KK = K * K
    wt = jnp.transpose(weight, (0, 2, 3, 1)).reshape(Cout, KK * Cin)

    # ---- tiling ---------------------------------------------------------------
    in_item = jnp.dtype(xf.dtype).itemsize
    out_item = jnp.dtype(out_dtype).itemsize

    max_shift = (K - 1) * (Wp + 1)
    th = _round_up(max_shift + 1, 128)           # halo width, strictly > max shift

    def working_set_bytes(tq_):
        return ((2 * Cin * (tq_ + th)            # double-buffered main + halo
                 + Cout * KK * Cin               # resident flattened weight
                 + KK * Cin * tq_) * in_item     # im2col scratch
                + 2 * Cout * tq_ * out_item      # double-buffered output
                + Cout * tq_ * 4)                # f32 matmul result / ReLU temp

    n_want = max(2, (Q + q_tile_target - 1) // q_tile_target)
    if n_want % 2:
        n_want += 1                              # even grid: both v7x TCs busy
    tq = _round_up((Q + n_want - 1) // n_want, th)
    while tq < 4 * th and tq < Q:                # keep halo re-read <= ~25%/tile
        tq += th
    budget = 24 << 20                            # v7x-safe working-set target
    while tq > th and working_set_bytes(tq) > budget:
        tq -= th
    assert th % 128 == 0 and tq % 128 == 0 and tq % th == 0

    n_tiles = (Q + tq - 1) // tq
    ratio = tq // th                             # exact: tq is a multiple of th
    q_pad = n_tiles * tq
    q_ext = q_pad + th                           # room for the last tile's halo
    xf = jnp.pad(xf, ((0, 0), (0, q_ext - Q)))

    vmem_limit = int(min(max(int(1.25 * working_set_bytes(tq)), 4 << 20), 32 << 20))

    cost = pl.CostEstimate(
        flops=2 * KK * Cin * Cout * q_pad,
        transcendentals=0,
        bytes_accessed=(Cin * (q_pad + n_tiles * th) + Cout * KK * Cin) * in_item
                       + Cout * q_pad * out_item,
    )

    grid_spec = pltpu.PrefetchScalarGridSpec(
        num_scalar_prefetch=0,
        grid=(n_tiles,),
        in_specs=[
            pl.BlockSpec((Cin, tq), lambda t: (0, t)),                # main tile
            pl.BlockSpec((Cin, th), lambda t: (0, (t + 1) * ratio)),  # halo tile
            pl.BlockSpec((Cout, KK * Cin), lambda t: (0, 0)),         # resident W
        ],
        out_specs=pl.BlockSpec((Cout, tq), lambda t: (0, t)),         # lane-dense
        scratch_shapes=[pltpu.VMEM((KK * Cin, tq), xf.dtype)],        # im2col buf
    )

    y_wide = pl.pallas_call(
        functools.partial(_conv_im2col_kernel, K=K, Wp=Wp, apply_relu=relu),
        out_shape=jax.ShapeDtypeStruct((Cout, q_pad), out_dtype),
        grid_spec=grid_spec,
        compiler_params=pltpu.CompilerParams(
            dimension_semantics=("parallel",),
            vmem_limit_bytes=vmem_limit,
        ),
        cost_estimate=cost,
    )(xf, xf, wt)

    # ---- host glue: select valid conv anchors, back to NCHW -------------------
    # Wide column q = n*Hp*Wp + r*Wp + c is a valid output iff r = oh*stride and
    # c = ow*stride; everything else (image edges, tail padding) is discarded.
    y = y_wide[:, :Q].reshape(Cout, N, Hp, Wp)
    y = y[:, :, ::stride, ::stride][:, :, :OH, :OW]
    return jnp.transpose(y, (1, 0, 2, 3))


def _reference(x_nchw, weight, *, stride=1, relu=True):
    """Pure-JAX reference matching PyTorch Conv2d(padding_mode='reflect')."""
    K = weight.shape[-1]
    pad = K // 2
    xp = x_nchw
    if pad > 0:
        xp = jnp.pad(xp, ((0, 0), (0, 0), (pad, pad), (pad, pad)), mode="reflect")
    y = jax.lax.conv_general_dilated(
        xp, weight, window_strides=(stride, stride), padding="VALID",
        dimension_numbers=("NCHW", "OIHW", "NCHW"),
    )
    if relu:
        y = jnp.maximum(y, 0.0)
    return y


if __name__ == "__main__":
    # BasicConv(in_channel=4, out_channel=8, kernel_size=3, stride=1,
    #           bias=False, norm=False, relu=True, transpose=False)
    in_channel, out_channel, kernel_size = 4, 8, 3

    key = jax.random.PRNGKey(0)
    kx, kw = jax.random.split(key)
    x = jax.random.normal(kx, (2, in_channel, 16, 16), dtype=jnp.float32)
    weight = 0.1 * jax.random.normal(
        kw, (out_channel, in_channel, kernel_size, kernel_size), dtype=jnp.float32
    )

    # stride=1 (feat_extract[0/3/4]-style) — strict f32 check.
    y = basic_conv(x, weight, stride=1, relu=True)
    y = jax.block_until_ready(y)
    y_ref = _reference(x, weight, stride=1, relu=True)
    assert y.shape == y_ref.shape, (y.shape, y_ref.shape)
    err = float(jnp.max(jnp.abs(y - y_ref)))
    assert err < 1e-4, err

    # stride=2 (feat_extract[1/2]-style downsample) — same kernel, different
    # anchor selection on the host.
    y2 = basic_conv(x, weight, stride=2, relu=True)
    y2 = jax.block_until_ready(y2)
    y2_ref = _reference(x, weight, stride=2, relu=True)
    assert y2.shape == y2_ref.shape, (y2.shape, y2_ref.shape)
    err2 = float(jnp.max(jnp.abs(y2 - y2_ref)))
    assert err2 < 1e-4, err2

    print("KERNEL_OK")
</pallas_src>

<mosaic_0001>
module attributes {stable_mosaic.version = 11 : i64} {
  func.func @_conv_im2col_kernel(%arg0: i32, %arg1: memref<4x512xf32, #tpu.memory_space<vmem>>, %arg2: memref<4x128xf32, #tpu.memory_space<vmem>>, %arg3: memref<8x36xf32, #tpu.memory_space<vmem>>, %arg4: memref<8x512xf32, #tpu.memory_space<vmem>>, %arg5: memref<36x512xf32, #tpu.memory_space<vmem>>) attributes {dimension_semantics = [#tpu.dimension_semantics<parallel>], iteration_bounds = array<i64: 2>, scalar_prefetch = 0 : i64, scratch_operands = 1 : i64, tpu.core_type = #tpu.core_type<tc>, window_params = [{transform_indices = @transform_0, window_bounds = array<i64: 4, 512>}, {transform_indices = @transform_1, window_bounds = array<i64: 4, 128>}, {pipeline_mode = #tpu.pipeline_mode<synchronous>, transform_indices = @transform_2, window_bounds = array<i64: 8, 36>}, {transform_indices = @transform_3, window_bounds = array<i64: 8, 512>}]} {
    %c0 = arith.constant 0 : index
    %c0_0 = arith.constant 0 : index
    %0 = vector.load %arg1[%c0, %c0_0] : memref<4x512xf32, #tpu.memory_space<vmem>>, vector<4x512xf32>
    %c0_1 = arith.constant 0 : index
    %c0_2 = arith.constant 0 : index
    %1 = vector.load %arg5[%c0_1, %c0_2] : memref<36x512xf32, #tpu.memory_space<vmem>>, vector<4x512xf32>
    tpu.vector_store %arg5[%c0_1, %c0_2], %0 {strides = array<i32>} : memref<36x512xf32, #tpu.memory_space<vmem>>, vector<4x512xf32>,
    %c0_3 = arith.constant 0 : index
    %c1 = arith.constant 1 : index
    %2 = vector.load %arg1[%c0_3, %c1] : memref<4x512xf32, #tpu.memory_space<vmem>>, vector<4x511xf32>
    %c4 = arith.constant 4 : index
    %c0_4 = arith.constant 0 : index
    %3 = vector.load %arg5[%c4, %c0_4] : memref<36x512xf32, #tpu.memory_space<vmem>>, vector<4x511xf32>
    tpu.vector_store %arg5[%c4, %c0_4], %2 {strides = array<i32>} : memref<36x512xf32, #tpu.memory_space<vmem>>, vector<4x511xf32>,
    %c0_5 = arith.constant 0 : index
    %c0_6 = arith.constant 0 : index
    %4 = vector.load %arg2[%c0_5, %c0_6] : memref<4x128xf32, #tpu.memory_space<vmem>>, vector<4x1xf32>
    %c4_7 = arith.constant 4 : index
    %c511 = arith.constant 511 : index
    %5 = vector.load %arg5[%c4_7, %c511] : memref<36x512xf32, #tpu.memory_space<vmem>>, vector<4x1xf32>
    tpu.vector_store %arg5[%c4_7, %c511], %4 {strides = array<i32>} : memref<36x512xf32, #tpu.memory_space<vmem>>, vector<4x1xf32>,
    %c0_8 = arith.constant 0 : index
    %c2 = arith.constant 2 : index
    %6 = vector.load %arg1[%c0_8, %c2] : memref<4x512xf32, #tpu.memory_space<vmem>>, vector<4x510xf32>
    %c8 = arith.constant 8 : index
    %c0_9 = arith.constant 0 : index
    %7 = vector.load %arg5[%c8, %c0_9] : memref<36x512xf32, #tpu.memory_space<vmem>>, vector<4x510xf32>
    tpu.vector_store %arg5[%c8, %c0_9], %6 {strides = array<i32>} : memref<36x512xf32, #tpu.memory_space<vmem>>, vector<4x510xf32>,
    %c0_10 = arith.constant 0 : index
    %c0_11 = arith.constant 0 : index
    %8 = vector.load %arg2[%c0_10, %c0_11] : memref<4x128xf32, #tpu.memory_space<vmem>>, vector<4x2xf32>
    %c8_12 = arith.constant 8 : index
    %c510 = arith.constant 510 : index
    %9 = vector.load %arg5[%c8_12, %c510] : memref<36x512xf32, #tpu.memory_space<vmem>>, vector<4x2xf32>
    tpu.vector_store %arg5[%c8_12, %c510], %8 {strides = array<i32>} : memref<36x512xf32, #tpu.memory_space<vmem>>, vector<4x2xf32>,
    %c0_13 = arith.constant 0 : index
    %c18 = arith.constant 18 : index
    %10 = vector.load %arg1[%c0_13, %c18] : memref<4x512xf32, #tpu.memory_space<vmem>>, vector<4x494xf32>
    %c12 = arith.constant 12 : index
    %c0_14 = arith.constant 0 : index
    %11 = vector.load %arg5[%c12, %c0_14] : memref<36x512xf32, #tpu.memory_space<vmem>>, vector<4x494xf32>
    tpu.vector_store %arg5[%c12, %c0_14], %10 {strides = array<i32>} : memref<36x512xf32, #tpu.memory_space<vmem>>, vector<4x494xf32>,
    %c0_15 = arith.constant 0 : index
    %c0_16 = arith.constant 0 : index
    %12 = vector.load %arg2[%c0_15, %c0_16] : memref<4x128xf32, #tpu.memory_space<vmem>>, vector<4x18xf32>
    %c12_17 = arith.constant 12 : index
    %c494 = arith.constant 494 : index
    %13 = vector.load %arg5[%c12_17, %c494] : memref<36x512xf32, #tpu.memory_space<vmem>>, vector<4x18xf32>
    tpu.vector_store %arg5[%c12_17, %c494], %12 {strides = array<i32>} : memref<36x512xf32, #tpu.memory_space<vmem>>, vector<4x18xf32>,
    %c0_18 = arith.constant 0 : index
    %c19 = arith.constant 19 : index
    %14 = vector.load %arg1[%c0_18, %c19] : memref<4x512xf32, #tpu.memory_space<vmem>>, vector<4x493xf32>
    %c16 = arith.constant 16 : index
    %c0_19 = arith.constant 0 : index
    %15 = vector.load %arg5[%c16, %c0_19] : memref<36x512xf32, #tpu.memory_space<vmem>>, vector<4x493xf32>
    tpu.vector_store %arg5[%c16, %c0_19], %14 {strides = array<i32>} : memref<36x512xf32, #tpu.memory_space<vmem>>, vector<4x493xf32>,
    %c0_20 = arith.constant 0 : index
    %c0_21 = arith.constant 0 : index
    %16 = vector.load %arg2[%c0_20, %c0_21] : memref<4x128xf32, #tpu.memory_space<vmem>>, vector<4x19xf32>
    %c16_22 = arith.constant 16 : index
    %c493 = arith.constant 493 : index
    %17 = vector.load %arg5[%c16_22, %c493] : memref<36x512xf32, #tpu.memory_space<vmem>>, vector<4x19xf32>
    tpu.vector_store %arg5[%c16_22, %c493], %16 {strides = array<i32>} : memref<36x512xf32, #tpu.memory_space<vmem>>, vector<4x19xf32>,
    %c0_23 = arith.constant 0 : index
    %c20 = arith.constant 20 : index
    %18 = vector.load %arg1[%c0_23, %c20] : memref<4x512xf32, #tpu.memory_space<vmem>>, vector<4x492xf32>
    %c20_24 = arith.constant 20 : index
    %c0_25 = arith.constant 0 : index
    %19 = vector.load %arg5[%c20_24, %c0_25] : memref<36x512xf32, #tpu.memory_space<vmem>>, vector<4x492xf32>
    tpu.vector_store %arg5[%c20_24, %c0_25], %18 {strides = array<i32>} : memref<36x512xf32, #tpu.memory_space<vmem>>, vector<4x492xf32>,
    %c0_26 = arith.constant 0 : index
    %c0_27 = arith.constant 0 : index
    %20 = vector.load %arg2[%c0_26, %c0_27] : memref<4x128xf32, #tpu.memory_space<vmem>>, vector<4x20xf32>
    %c20_28 = arith.constant 20 : index
    %c492 = arith.constant 492 : index
    %21 = vector.load %arg5[%c20_28, %c492] : memref<36x512xf32, #tpu.memory_space<vmem>>, vector<4x20xf32>
    tpu.vector_store %arg5[%c20_28, %c492], %20 {strides = array<i32>} : memref<36x512xf32, #tpu.memory_space<vmem>>, vector<4x20xf32>,
    %c0_29 = arith.constant 0 : index
    %c36 = arith.constant 36 : index
    %22 = vector.load %arg1[%c0_29, %c36] : memref<4x512xf32, #tpu.memory_space<vmem>>, vector<4x476xf32>
    %c24 = arith.constant 24 : index
    %c0_30 = arith.constant 0 : index
    %23 = vector.load %arg5[%c24, %c0_30] : memref<36x512xf32, #tpu.memory_space<vmem>>, vector<4x476xf32>
    tpu.vector_store %arg5[%c24, %c0_30], %22 {strides = array<i32>} : memref<36x512xf32, #tpu.memory_space<vmem>>, vector<4x476xf32>,
    %c0_31 = arith.constant 0 : index
    %c0_32 = arith.constant 0 : index
    %24 = vector.load %arg2[%c0_31, %c0_32] : memref<4x128xf32, #tpu.memory_space<vmem>>, vector<4x36xf32>
    %c24_33 = arith.constant 24 : index
    %c476 = arith.constant 476 : index
    %25 = vector.load %arg5[%c24_33, %c476] : memref<36x512xf32, #tpu.memory_space<vmem>>, vector<4x36xf32>
    tpu.vector_store %arg5[%c24_33, %c476], %24 {strides = array<i32>} : memref<36x512xf32, #tpu.memory_space<vmem>>, vector<4x36xf32>,
    %c0_34 = arith.constant 0 : index
    %c37 = arith.constant 37 : index
    %26 = vector.load %arg1[%c0_34, %c37] : memref<4x512xf32, #tpu.memory_space<vmem>>, vector<4x475xf32>
    %c28 = arith.constant 28 : index
    %c0_35 = arith.constant 0 : index
    %27 = vector.load %arg5[%c28, %c0_35] : memref<36x512xf32, #tpu.memory_space<vmem>>, vector<4x475xf32>
    tpu.vector_store %arg5[%c28, %c0_35], %26 {strides = array<i32>} : memref<36x512xf32, #tpu.memory_space<vmem>>, vector<4x475xf32>,
    %c0_36 = arith.constant 0 : index
    %c0_37 = arith.constant 0 : index
    %28 = vector.load %arg2[%c0_36, %c0_37] : memref<4x128xf32, #tpu.memory_space<vmem>>, vector<4x37xf32>
    %c28_38 = arith.constant 28 : index
    %c475 = arith.constant 475 : index
    %29 = vector.load %arg5[%c28_38, %c475] : memref<36x512xf32, #tpu.memory_space<vmem>>, vector<4x37xf32>
    tpu.vector_store %arg5[%c28_38, %c475], %28 {strides = array<i32>} : memref<36x512xf32, #tpu.memory_space<vmem>>, vector<4x37xf32>,
    %c0_39 = arith.constant 0 : index
    %c38 = arith.constant 38 : index
    %30 = vector.load %arg1[%c0_39, %c38] : memref<4x512xf32, #tpu.memory_space<vmem>>, vector<4x474xf32>
    %c32 = arith.constant 32 : index
    %c0_40 = arith.constant 0 : index
    %31 = vector.load %arg5[%c32, %c0_40] : memref<36x512xf32, #tpu.memory_space<vmem>>, vector<4x474xf32>
    tpu.vector_store %arg5[%c32, %c0_40], %30 {strides = array<i32>} : memref<36x512xf32, #tpu.memory_space<vmem>>, vector<4x474xf32>,
    %c0_41 = arith.constant 0 : index
    %c0_42 = arith.constant 0 : index
    %32 = vector.load %arg2[%c0_41, %c0_42] : memref<4x128xf32, #tpu.memory_space<vmem>>, vector<4x38xf32>
    %c32_43 = arith.constant 32 : index
    %c474 = arith.constant 474 : index
    %33 = vector.load %arg5[%c32_43, %c474] : memref<36x512xf32, #tpu.memory_space<vmem>>, vector<4x38xf32>
    tpu.vector_store %arg5[%c32_43, %c474], %32 {strides = array<i32>} : memref<36x512xf32, #tpu.memory_space<vmem>>, vector<4x38xf32>,
    %c0_44 = arith.constant 0 : index
    %c0_45 = arith.constant 0 : index
    %34 = vector.load %arg3[%c0_44, %c0_45] : memref<8x36xf32, #tpu.memory_space<vmem>>, vector<8x36xf32>
    %c0_46 = arith.constant 0 : index
    %c0_47 = arith.constant 0 : index
    %35 = vector.load %arg5[%c0_46, %c0_47] : memref<36x512xf32, #tpu.memory_space<vmem>>, vector<36x512xf32>
    %cst = arith.constant dense<0.000000e+00> : vector<8x512xf32>
    %36 = tpu.matmul %34, %35, %cst {dimension_numbers = #tpu.dot_dimension_numbers<[1], [0], [0], [1], [0, 0, 1, 1], [], []>} : vector<8x36xf32>, vector<36x512xf32>, vector<8x512xf32> -> vector<8x512xf32>
    %cst_48 = arith.constant 0.000000e+00 : f32
    %37 = vector.broadcast %cst_48 : f32 to vector<8x512xf32>
    %38 = arith.maximumf %36, %37 : vector<8x512xf32>
    %c0_49 = arith.constant 0 : index
    %c0_50 = arith.constant 0 : index
    %39 = vector.load %arg4[%c0_49, %c0_50] : memref<8x512xf32, #tpu.memory_space<vmem>>, vector<8x512xf32>
    tpu.vector_store %arg4[%c0_49, %c0_50], %38 {strides = array<i32>} : memref<8x512xf32, #tpu.memory_space<vmem>>, vector<8x512xf32>,
    return
  }
  func.func @transform_0(%arg0: i32) -> (i32, i32) {
    %c0_i32 = arith.constant 0 : i32
    %c0_i32_0 = arith.constant 0 : i32
    return %c0_i32, %arg0 : i32, i32
  }
  func.func @transform_1(%arg0: i32) -> (i32, i32) {
    %c1_i32 = arith.constant 1 : i32
    %0 = arith.addi %arg0, %c1_i32 : i32
    %c4_i32 = arith.constant 4 : i32
    %1 = arith.muli %0, %c4_i32 : i32
    %c0_i32 = arith.constant 0 : i32
    %c0_i32_0 = arith.constant 0 : i32
    return %c0_i32, %1 : i32, i32
  }
  func.func @transform_2(%arg0: i32) -> (i32, i32) {
    %c0_i32 = arith.constant 0 : i32
    %c0_i32_0 = arith.constant 0 : i32
    %c0_i32_1 = arith.constant 0 : i32
    return %c0_i32, %c0_i32_0 : i32, i32
  }
  func.func @transform_3(%arg0: i32) -> (i32, i32) {
    %c0_i32 = arith.constant 0 : i32
    %c0_i32_0 = arith.constant 0 : i32
    return %c0_i32, %arg0 : i32, i32
  }
}

</mosaic_0001>

<llo_original>
// kernel: tpu_custom_call.1
$region0: #{tpu_custom_call.1}
  #allocation0 [shape = 'u32[]', space=smem, size = 0x4, offset = 0x4, fixed_abs, tag = 'smem constant byte address 0x4 - core index']
  #allocation1 [shape = 'u32[144,128]{1,0:T(1,128)}', space=vmem, size = 0x12000, scoped, tag = 'internal scratch']
  #allocation2 [shape = 'f32[36,512]{1,0:T(8,128)}', space=vmem, size = 0x14000, scoped, tag = 'scratch operand']
  %s0 = inlined_call_operand.hbm [shape: f32[4,1152], index: 0, kind: input, shape index: {}]
  %s1 = inlined_call_operand.hbm [shape: f32[4,1152], index: 1, kind: input, shape index: {}]
  %s2 = inlined_call_operand.hbm [shape: f32[8,36], index: 2, kind: input, shape index: {}]
  %s3 = inlined_call_operand.hbm [shape: f32[8,1024], index: 3, kind: output, shape index: {}]
  %s4 = sld [smem:[#allocation0]]
  $region57: #{tpu_custom_call.1} parent=0
    _
  %s6 = ssub.s32 1, %s4
  %s7 = scalar_select 0, %s6, %s4
  $region1: #{tpu_custom_call.1} parent=0
    #allocation3 [shape = 'u8[16384]{0}', space=vmem, size = 0x4000, scoped, tag = 'input window, operand 0']
    #allocation4 [shape = 's32[2]{0}', space=sflag, size = 0x8, scoped, tag = 'scoped memory for tpu_custom_call.1']
    #allocation5 [shape = 's32[2]{0}', space=sflag, size = 0x8, scoped, tag = 'scoped memory for tpu_custom_call.1']
    #allocation6 [shape = 'u8[4096]{0}', space=vmem, size = 0x1000, scoped, tag = 'input window, operand 1']
    #allocation7 [shape = 's32[2]{0}', space=sflag, size = 0x8, scoped, tag = 'scoped memory for tpu_custom_call.1']
    #allocation8 [shape = 'u8[4096]{0}', space=vmem, size = 0x1000, scoped, tag = 'input window, operand 2, single buffered']
    #allocation9 [shape = 'u8[32768]{0}', space=vmem, size = 0x8000, scoped, tag = 'output window, operand 0']
    %8 = vsyncpa [#allocation4], 0
    %s9 = scalar_lea.sflag [#allocation4], 1
    %10 = vsyncpa %s9, 0
    %11 = vsyncpa [#allocation7], 0
    %s12 = scalar_lea.sflag [#allocation7], 1
    %13 = vsyncpa %s12, 0
    %14 = vsyncpa [#allocation5], 0
    %s15 = scalar_lea.sflag [#allocation5], 1
    %16 = vsyncpa %s15, 0
    loop: start=0, step=1, limit=4
    $region2: #{tpu_custom_call.1} parent=1 // loop_pre_header
      _
    $region3: #{tpu_custom_call.1} parent=1 // loop_header
      %s18 = sphi 0, %s22
      %p19 = scmp.ge.s32.totalorder %s18, 4
      %s28 = sphi 0, %s30
      %s31 = sphi 0, %s28
      %s32 = sphi 0, %s31
      %s48 = sphi 0, %s32
      %s58 = sphi 0, %s60
      %s61 = sphi 0, %s58
      %s62 = sphi 0, %s61
      %s78 = sphi 0, %s62
      %s82 = sphi 0, %s82
      %s84 = sphi 0, %s82
      %s85 = sphi 0, %s84
      %s99 = sphi 0, %s85
      %s105 = sphi 0, %s107
      %s108 = sphi 0, %s105
      %s109 = sphi 0, %s108
      %s125 = sphi 0, %s109
    $region4: #{tpu_custom_call.1} parent=1 // loop_header_branch
      %21 = sbr.rel (%p19) target = $region8
    $region5: #{tpu_custom_call.1} parent=1 // loop_body
      %s23 = ssub.s32 %s18, 1
      %s24 = ssub.s32 %s18, 2
      %s25 = sadd.s32 %s18, 1
      %s26 = ssub.s32 %s18, %s25
      %p27 = scmp.eq.s32.totalorder %s26, 0
      %s29 = sadd.s32 %s28, 1
      %s30 = scalar_select %p27, %s28, %s29
      %p33 = pneg %p27
      %p34 = scmp.eq.s32.totalorder %s18, 1
      %p35 = por %p33, %p34
      %p36 = scmp.ne.s32.totalorder %s28, %s31
      %p37 = scmp.eq.s32.totalorder %s18, 0
      %p38 = por %p36, %p37
      %p39 = scmp.ne.s32.totalorder %s28, %s31
      %p40 = scmp.eq.s32.totalorder %s23, 1
      %p41 = por %p39, %p40
      %p42 = scmp.ne.s32.totalorder %s31, %s32
      %p43 = scmp.eq.s32.totalorder %s23, 0
      %p44 = por %p42, %p43
      %p45 = scmp.ne.s32.totalorder %s31, %s32
      %p46 = scmp.eq.s32.totalorder %s24, 1
      %p47 = por %p45, %p46
      %p49 = scmp.ne.s32.totalorder %s32, %s48
      %p50 = scmp.eq.s32.totalorder %s24, 0
      %p51 = por %p49, %p50
      %s52 = sadd.s32 %s18, 1
      %s53 = smul.u32 %s52, 4
      %s54 = sadd.s32 %s25, 1
      %s55 = smul.u32 %s54, 4
      %s56 = ssub.s32 %s53, %s55
      %p57 = scmp.eq.s32.totalorder %s56, 0
      %s59 = sadd.s32 %s58, 1
      %s60 = scalar_select %p57, %s58, %s59
      %p63 = pneg %p57
      %p64 = scmp.eq.s32.totalorder %s18, 1
      %p65 = por %p63, %p64
      %p66 = scmp.ne.s32.totalorder %s58, %s61
      %p67 = scmp.eq.s32.totalorder %s18, 0
      %p68 = por %p66, %p67
      %p69 = scmp.ne.s32.totalorder %s58, %s61
      %p70 = scmp.eq.s32.totalorder %s23, 1
      %p71 = por %p69, %p70
      %p72 = scmp.ne.s32.totalorder %s61, %s62
      %p73 = scmp.eq.s32.totalorder %s23, 0
      %p74 = por %p72, %p73
      %p75 = scmp.ne.s32.totalorder %s61, %s62
      %p76 = scmp.eq.s32.totalorder %s24, 1
      %p77 = por %p75, %p76
      %p79 = scmp.ne.s32.totalorder %s62, %s78
      %p80 = scmp.eq.s32.totalorder %s24, 0
      %p81 = por %p79, %p80
      %s83 = sadd.s32 %s82, 1
      %p86 = scmp.eq.s32.totalorder %s18, 1
      %p87 = scmp.ne.s32.totalorder %s82, %s84
      %p88 = scmp.eq.s32.totalorder %s18, 0
      %p89 = por %p87, %p88
      %p90 = scmp.ne.s32.totalorder %s82, %s84
      %p91 = scmp.eq.s32.totalorder %s23, 1
      %p92 = por %p90, %p91
      %p93 = scmp.ne.s32.totalorder %s84, %s85
      %p94 = scmp.eq.s32.totalorder %s23, 0
      %p95 = por %p93, %p94
      %p96 = scmp.ne.s32.totalorder %s84, %s85
      %p97 = scmp.eq.s32.totalorder %s24, 1
      %p98 = por %p96, %p97
      %p100 = scmp.ne.s32.totalorder %s85, %s99
      %p101 = scmp.eq.s32.totalorder %s24, 0
      %p102 = por %p100, %p101
      %s103 = ssub.s32 %s18, %s25
      %p104 = scmp.eq.s32.totalorder %s103, 0
      %s106 = sadd.s32 %s105, 1
      %s107 = scalar_select %p104, %s105, %s106
      %p110 = pneg %p104
      %p111 = scmp.eq.s32.totalorder %s18, 1
      %p112 = por %p110, %p111
      %p113 = scmp.ne.s32.totalorder %s105, %s108
      %p114 = scmp.eq.s32.totalorder %s18, 0
      %p115 = por %p113, %p114
      %p116 = scmp.ne.s32.totalorder %s105, %s108
      %p117 = scmp.eq.s32.totalorder %s23, 1
      %p118 = por %p116, %p117
      %p119 = scmp.ne.s32.totalorder %s108, %s109
      %p120 = scmp.eq.s32.totalorder %s23, 0
      %p121 = por %p119, %p120
      %p122 = scmp.ne.s32.totalorder %s108, %s109
      %p123 = scmp.eq.s32.totalorder %s24, 1
      %p124 = por %p122, %p123
      %p126 = scmp.ne.s32.totalorder %s109, %s125
      %p127 = scmp.eq.s32.totalorder %s24, 0
      %p128 = por %p126, %p127
      %p129 = scmp.le.s32.totalorder 1, %s18
      %p130 = scmp.lt.s32.totalorder %s18, 3
      %p131 = pnand %p129, %p130
      %p132 = pneg %p131
      // Predicated region
      $region9: #{tpu_custom_call.1} parent=5 // pred_check
        _
      $region10: #{tpu_custom_call.1} parent=5 // pred_check_branch
        %134 = sbr.rel (%p131) target = $region12
      $region11: #{tpu_custom_call.1} parent=5 // pred_region
        %s135 = ssub.s32 %s18, 1
        // Predicated region
        $region13: #{tpu_custom_call.1} parent=11 // pred_check
          %p136 = pneg %p95
        $region14: #{tpu_custom_call.1} parent=11 // pred_check_branch
          %138 = sbr.rel (%p136) target = $region16
        $region15: #{tpu_custom_call.1} parent=11 // pred_region
          %s140 = ssub.s32 128, 128
          %141 = vsyncadd [#allocation7], %s140
          %s143 = sshll.u32 [#allocation8], 4
          %s144 = int_to_ptr.vmem [resolvable:$true] %s143
          %146 = dma.hbm_to_vmem [thread:$0]  %s2, 128, %s144, [#allocation7]
        $region16: #{tpu_custom_call.1} parent=11 // pred_fallthru
          _
      $region12: #{tpu_custom_call.1} parent=5 // pred_fallthru
        _
      %p147 = scmp.lt.s32.totalorder %s18, 2
      // Predicated region
      $region17: #{tpu_custom_call.1} parent=5 // pred_check
        %p148 = pneg %p147
      $region18: #{tpu_custom_call.1} parent=5 // pred_check_branch
        %150 = sbr.rel (%p148) target = $region20
      $region19: #{tpu_custom_call.1} parent=5 // pred_region
        // Predicated region
        $region21: #{tpu_custom_call.1} parent=19 // pred_check
          %p151 = pneg %p38
        $region22: #{tpu_custom_call.1} parent=19 // pred_check_branch
          %153 = sbr.rel (%p151) target = $region24
        $region23: #{tpu_custom_call.1} parent=19 // pred_region
          %s154 = sand.u32 %s28, 1
          %s155 = scalar_lea.sflag [#allocation4], %s154
          %s156 = sand.u32 %s28, 1
          %s157 = smul.addr %s156, 16
          %s158 = scalar_lea.vmem [#allocation3], %s157
          %s159 = smul.u32 4, %s18
          %s160 = ssub.s32 9, %s159
          %p161 = scmp.lt.s32.totalorder %s160, 4
          %s162 = scalar_select %p161, %s160, 4
          %s163 = smul.u32 64, %s162
          %s165 = ssub.s32 256, %s163
          %166 = vsyncadd %s155, %s165
          %p167 = scmp.ne.s32.totalorder 0, %s163
          %s168 = smul.addr %s159, 64
          %s169 = scalar_lea.hbm %s0, %s168
          %s170 = smul.u32 %s162, 4
          %s171 = sshll.u32 %s170, 4
          %s172 = sshll.u32 %s158, 4
          %s173 = int_to_ptr.vmem [resolvable:$true] %s172
          %175 = dma.hbm_to_vmem [thread:$0]  (%p167), %s169, %s171, %s173, %s155
        $region24: #{tpu_custom_call.1} parent=19 // pred_fallthru
          _
        // Predicated region
        $region25: #{tpu_custom_call.1} parent=19 // pred_check
          %p176 = pneg %p68
        $region26: #{tpu_custom_call.1} parent=19 // pred_check_branch
          %178 = sbr.rel (%p176) target = $region28
        $region27: #{tpu_custom_call.1} parent=19 // pred_region
          %s179 = sand.u32 %s18, 1
          %s180 = scalar_lea.sflag [#allocation7], %s179
          %s181 = sand.u32 %s58, 1
          %s182 = smul.addr %s181, 4
          %s183 = scalar_lea.vmem [#allocation6], %s182
          %s184 = sadd.s32 %s18, 1
          %s185 = smul.u32 %s184, 4
          %s187 = ssub.s32 64, 64
          %188 = vsyncadd %s180, %s187
          %s189 = smul.addr %s185, 64
          %s190 = scalar_lea.hbm %s1, %s189
          %s192 = sshll.u32 %s183, 4
          %s193 = int_to_ptr.vmem [resolvable:$true] %s192
          %195 = dma.hbm_to_vmem [thread:$0]  %s190, 64, %s193, %s180
        $region28: #{tpu_custom_call.1} parent=19 // pred_fallthru
          _
      $region20: #{tpu_custom_call.1} parent=5 // pred_fallthru
        _
      %p196 = scmp.le.s32.totalorder 1, %s18
      %p197 = scmp.lt.s32.totalorder %s18, 3
      %p198 = pnand %p196, %p197
      %p199 = pneg %p198
      // Predicated region
      $region29: #{tpu_custom_call.1} parent=5 // pred_check
        _
      $region30: #{tpu_custom_call.1} parent=5 // pred_check_branch
        %201 = sbr.rel (%p198) target = $region32
      $region31: #{tpu_custom_call.1} parent=5 // pred_region
        %s202 = ssub.s32 %s18, 1
        %s203 = sand.u32 %s31, 1
        %s204 = scalar_lea.sflag [#allocation4], %s203
        %s205 = sand.u32 %s31, 1
        %s206 = smul.addr %s205, 16
        %s207 = scalar_lea.vmem [#allocation3], %s206
        // Predicated region
        $region33: #{tpu_custom_call.1} parent=31 // pred_check
          %p208 = pneg %p44
        $region34: #{tpu_custom_call.1} parent=31 // pred_check_branch
          %210 = sbr.rel (%p208) target = $region36
        $region35: #{tpu_custom_call.1} parent=31 // pred_region
          %211 = dma.done %s204, 256
        $region36: #{tpu_custom_call.1} parent=31 // pred_fallthru
          _
        %s212 = sand.u32 %s23, 1
        %s213 = scalar_lea.sflag [#allocation7], %s212
        %s214 = sand.u32 %s61, 1
        %s215 = smul.addr %s214, 4
        %s216 = scalar_lea.vmem [#allocation6], %s215
        // Predicated region
        $region37: #{tpu_custom_call.1} parent=31 // pred_check
          %p217 = pneg %p74
        $region38: #{tpu_custom_call.1} parent=31 // pred_check_branch
          %219 = sbr.rel (%p217) target = $region40
        $region39: #{tpu_custom_call.1} parent=31 // pred_region
          %220 = dma.done %s213, 64
        $region40: #{tpu_custom_call.1} parent=31 // pred_fallthru
          _
        // Predicated region
        $region41: #{tpu_custom_call.1} parent=31 // pred_check
          %p221 = pneg %p95
        $region42: #{tpu_custom_call.1} parent=31 // pred_check_branch
          %223 = sbr.rel (%p221) target = $region44
        $region43: #{tpu_custom_call.1} parent=31 // pred_region
          %224 = dma.done [#allocation7], 128
        $region44: #{tpu_custom_call.1} parent=31 // pred_fallthru
          _
        %s225 = sand.u32 %s31, 1
        %s226 = scalar_lea.sflag [#allocation4], %s225
        %s227 = sand.u32 %s31, 1
        %s228 = smul.addr %s227, 16
        %s229 = scalar_lea.vmem [#allocation3], %s228
        %p230 = pneg %p44
        %p231 = pneg %p41
        %s232 = sand.u32 %s23, 1
        %s233 = scalar_lea.sflag [#allocation7], %s232
        %s234 = sand.u32 %s61, 1
        %s235 = smul.addr %s234, 4
        %s236 = scalar_lea.vmem [#allocation6], %s235
        %p237 = pneg %p74
        %p238 = pneg %p71
        %p239 = pneg %p95
        %p240 = pneg %p92
        %p241 = pneg %p121
        %p242 = pneg %p118
        %s243 = sand.u32 %s108, 1
        %s244 = scalar_lea.sflag [#allocation5], %s243
        %s245 = sand.u32 %s108, 1
        %s246 = smul.addr %s245, 32
        %s247 = scalar_lea.vmem [#allocation9], %s246
        %s248 = smul.u32 4, %s23
        %s249 = ssub.s32 9, %s248
        %p250 = scmp.lt.s32.totalorder %s249, 4
        %s251 = scalar_select %p250, %s249, 4
        %s252 = smul.u32 64, %s251
        %s253 = sadd.s32 %s23, 1
        %s254 = smul.u32 %s253, 4
        %s255 = smul.u32 4, %s23
        %v256 = vld [vmem:[%s207] sm:$0xff]
        %v257 = vld [vmem:[%s207 + $0x8] sm:$0xff]
        %v260 = vcombine.high %v256, %v256
        %v261 = vcombine.high %v257, %v257
        %264 = vst [vmem:[#allocation2] sm:$0xf] %v256
        %265 = vst [vmem:[#allocation2 + $0x8] sm:$0xf] %v260
        %266 = vst [vmem:[#allocation2 + $0x10] sm:$0xf] %v257
        %267 = vst [vmem:[#allocation2 + $0x18] sm:$0xf] %v261
        %v268 = vld [vmem:[%s207] sm:$0xff]
        %v269 = vld [vmem:[%s207 + $0x8] sm:$0xff]
        %v272 = vcombine.low %v268, %v268
        %v273 = vcombine.low %v269, %v269
        %274 = vrot.lane.b32.xlu0 %v272, 127
        %v275 = vpop.permute.xlu0 %274
        %276 = vrot.lane.b32.xlu0 %v268, 127
        %v277 = vpop.permute.xlu0 %276
        %278 = vrot.lane.b32.xlu0 %v273, 127
        %v279 = vpop.permute.xlu0 %278
        %280 = vrot.lane.b32.xlu0 %v269, 127
        %v281 = vpop.permute.xlu0 %280
        %vm282 = vcmask 1039360
        %v283 = vsel %vm282, %v275, %v277
        %v284 = vsel %vm282, %v277, %v279
        %v285 = vsel %vm282, %v279, %v281
        %290 = vst [vmem:[#allocation2] sm:$0xf0] %v283
        %291 = vst [vmem:[#allocation2 + $0x8] sm:$0xf0] %v284
        %292 = vst [vmem:[#allocation2 + $0x10] sm:$0xf0] %v285
        %vm293 = vcmask 1039364
        %294 = vst.msk [vmem:[#allocation2 + $0x18] sm:$0xf0] %vm293, %v281
        %v295 = vld [vmem:[%s216] sm:$0xf]
        %v297 = vrot.slane %v295, 4
        %298 = vrot.lane.b32.xlu0 %v297, 127
        %v299 = vpop.permute.xlu0 %298
        %vm301 = vcmask 1048572
        %302 = vst.msk [vmem:[#allocation2 + $0x18] sm:$0xf0] %vm301, %v299
        %v303 = vld [vmem:[%s207] sm:$0xff]
        %v304 = vld [vmem:[%s207 + $0x8] sm:$0xff]
        %v307 = vcombine.high %v303, %v303
        %v308 = vcombine.high %v304, %v304
        %309 = vrot.lane.b32.xlu0 %v303, 126
        %v310 = vpop.permute.xlu0 %309
        %311 = vrot.lane.b32.xlu0 %v307, 126
        %v312 = vpop.permute.xlu0 %311
        %313 = vrot.lane.b32.xlu0 %v304, 126
        %v314 = vpop.permute.xlu0 %313
        %315 = vrot.lane.b32.xlu0 %v308, 126
        %v316 = vpop.permute.xlu0 %315
        %vm317 = vcmask 1031168
        %v318 = vsel %vm317, %v310, %v312
        %v319 = vsel %vm317, %v312, %v314
        %v320 = vsel %vm317, %v314, %v316
        %325 = vst [vmem:[#allocation2 + $0x20] sm:$0xf] %v318
        %326 = vst [vmem:[#allocation2 + $0x28] sm:$0xf] %v319
        %327 = vst [vmem:[#allocation2 + $0x30] sm:$0xf] %v320
        %vm328 = vcmask 1027072
        %329 = vst.msk [vmem:[#allocation2 + $0x38] sm:$0xf] %vm328, %v316
        %v330 = vld [vmem:[%s216] sm:$0xf]
        %332 = vrot.lane.b32.xlu0 %v330, 126
        %v333 = vpop.permute.xlu0 %332
        %vm335 = vcmask 1044464
        %336 = vst.msk [vmem:[#allocation2 + $0x38] sm:$0xf] %vm335, %v333
        %v337 = vld [vmem:[%s207] sm:$0xff]
        %v338 = vld [vmem:[%s207 + $0x8] sm:$0xff]
        %v341 = vcombine.low %v337, %v337
        %v342 = vcombine.low %v338, %v338
        %343 = vrot.lane.b32.xlu0 %v341, 110
        %v344 = vpop.permute.xlu0 %343
        %345 = vrot.lane.b32.xlu0 %v337, 110
        %v346 = vpop.permute.xlu0 %345
        %347 = vrot.lane.b32.xlu0 %v342, 110
        %v348 = vpop.permute.xlu0 %347
        %349 = vrot.lane.b32.xlu0 %v338, 110
        %v350 = vpop.permute.xlu0 %349
        %vm351 = vcmask 900096
        %v352 = vsel %vm351, %v344, %v346
        %v353 = vsel %vm351, %v346, %v348
        %v354 = vsel %vm351, %v348, %v350
        %359 = vst [vmem:[#allocation2 + $0x20] sm:$0xf0] %v352
        %360 = vst [vmem:[#allocation2 + $0x28] sm:$0xf0] %v353
        %361 = vst [vmem:[#allocation2 + $0x30] sm:$0xf0] %v354
        %vm362 = vcmask 900100
        %363 = vst.msk [vmem:[#allocation2 + $0x38] sm:$0xf0] %vm362, %v350
        %v364 = vld [vmem:[%s216] sm:$0xf]
        %v366 = vrot.slane %v364, 4
        %367 = vrot.lane.b32.xlu0 %v366, 110
        %v368 = vpop.permute.xlu0 %367
        %vm370 = vcmask 1048436
        %371 = vst.msk [vmem:[#allocation2 + $0x38] sm:$0xf0] %vm370, %v368
        %v372 = vld [vmem:[%s207] sm:$0xff]
        %v373 = vld [vmem:[%s207 + $0x8] sm:$0xff]
        %v376 = vcombine.high %v372, %v372
        %v377 = vcombine.high %v373, %v373
        %378 = vrot.lane.b32.xlu0 %v372, 109
        %v379 = vpop.permute.xlu0 %378
        %380 = vrot.lane.b32.xlu0 %v376, 109
        %v381 = vpop.permute.xlu0 %380
        %382 = vrot.lane.b32.xlu0 %v373, 109
        %v383 = vpop.permute.xlu0 %382
        %384 = vrot.lane.b32.xlu0 %v377, 109
        %v385 = vpop.permute.xlu0 %384
        %vm386 = vcmask 891904
        %v387 = vsel %vm386, %v379, %v381
        %v388 = vsel %vm386, %v381, %v383
        %v389 = vsel %vm386, %v383, %v385
        %394 = vst [vmem:[#allocation2 + $0x40] sm:$0xf] %v387
        %395 = vst [vmem:[#allocation2 + $0x48] sm:$0xf] %v388
        %396 = vst [vmem:[#allocation2 + $0x50] sm:$0xf] %v389
        %vm397 = vcmask 887808
        %398 = vst.msk [vmem:[#allocation2 + $0x58] sm:$0xf] %vm397, %v385
        %v399 = vld [vmem:[%s216] sm:$0xf]
        %401 = vrot.lane.b32.xlu0 %v399, 109
        %v402 = vpop.permute.xlu0 %401
        %vm404 = vcmask 1044328
        %405 = vst.msk [vmem:[#allocation2 + $0x58] sm:$0xf] %vm404, %v402
        %v406 = vld [vmem:[%s207] sm:$0xff]
        %v407 = vld [vmem:[%s207 + $0x8] sm:$0xff]
        %v410 = vcombine.low %v406, %v406
        %v411 = vcombine.low %v407, %v407
        %412 = vrot.lane.b32.xlu0 %v410, 108
        %v413 = vpop.permute.xlu0 %412
        %414 = vrot.lane.b32.xlu0 %v406, 108
        %v415 = vpop.permute.xlu0 %414
        %416 = vrot.lane.b32.xlu0 %v411, 108
        %v417 = vpop.permute.xlu0 %416
        %418 = vrot.lane.b32.xlu0 %v407, 108
        %v419 = vpop.permute.xlu0 %418
        %vm420 = vcmask 883712
        %v421 = vsel %vm420, %v413, %v415
        %v422 = vsel %vm420, %v415, %v417
        %v423 = vsel %vm420, %v417, %v419
        %428 = vst [vmem:[#allocation2 + $0x40] sm:$0xf0] %v421
        %429 = vst [vmem:[#allocation2 + $0x48] sm:$0xf0] %v422
        %430 = vst [vmem:[#allocation2 + $0x50] sm:$0xf0] %v423
        %vm431 = vcmask 883716
        %432 = vst.msk [vmem:[#allocation2 + $0x58] sm:$0xf0] %vm431, %v419
        %v433 = vld [vmem:[%s216] sm:$0xf]
        %v435 = vrot.slane %v433, 4
        %436 = vrot.lane.b32.xlu0 %v435, 108
        %v437 = vpop.permute.xlu0 %436
        %vm439 = vcmask 1048420
        %440 = vst.msk [vmem:[#allocation2 + $0x58] sm:$0xf0] %vm439, %v437
        %v441 = vld [vmem:[%s207] sm:$0xff]
        %v442 = vld [vmem:[%s207 + $0x8] sm:$0xff]
        %v445 = vcombine.high %v441, %v441
        %v446 = vcombine.high %v442, %v442
        %447 = vrot.lane.b32.xlu0 %v441, 92
        %v448 = vpop.permute.xlu0 %447
        %449 = vrot.lane.b32.xlu0 %v445, 92
        %v450 = vpop.permute.xlu0 %449
        %451 = vrot.lane.b32.xlu0 %v442, 92
        %v452 = vpop.permute.xlu0 %451
        %453 = vrot.lane.b32.xlu0 %v446, 92
        %v454 = vpop.permute.xlu0 %453
        %vm455 = vcmask 752640
        %v456 = vsel %vm455, %v448, %v450
        %v457 = vsel %vm455, %v450, %v452
        %v458 = vsel %vm455, %v452, %v454
        %463 = vst [vmem:[#allocation2 + $0x60] sm:$0xf] %v456
        %464 = vst [vmem:[#allocation2 + $0x68] sm:$0xf] %v457
        %465 = vst [vmem:[#allocation2 + $0x70] sm:$0xf] %v458
        %vm466 = vcmask 748544
        %467 = vst.msk [vmem:[#allocation2 + $0x78] sm:$0xf] %vm466, %v454
        %v468 = vld [vmem:[%s216] sm:$0xf]
        %470 = vrot.lane.b32.xlu0 %v468, 92
        %v471 = vpop.permute.xlu0 %470
        %vm473 = vcmask 1044192
        %474 = vst.msk [vmem:[#allocation2 + $0x78] sm:$0xf] %vm473, %v471
        %v475 = vld [vmem:[%s207] sm:$0xff]
        %v476 = vld [vmem:[%s207 + $0x8] sm:$0xff]
        %v479 = vcombine.low %v475, %v475
        %v480 = vcombine.low %v476, %v476
        %481 = vrot.lane.b32.xlu0 %v479, 91
        %v482 = vpop.permute.xlu0 %481
        %483 = vrot.lane.b32.xlu0 %v475, 91
        %v484 = vpop.permute.xlu0 %483
        %485 = vrot.lane.b32.xlu0 %v480, 91
        %v486 = vpop.permute.xlu0 %485
        %487 = vrot.lane.b32.xlu0 %v476, 91
        %v488 = vpop.permute.xlu0 %487
        %vm489 = vcmask 744448
        %v490 = vsel %vm489, %v482, %v484
        %v491 = vsel %vm489, %v484, %v486
        %v492 = vsel %vm489, %v486, %v488
        %497 = vst [vmem:[#allocation2 + $0x60] sm:$0xf0] %v490
        %498 = vst [vmem:[#allocation2 + $0x68] sm:$0xf0] %v491
        %499 = vst [vmem:[#allocation2 + $0x70] sm:$0xf0] %v492
        %vm500 = vcmask 744452
        %501 = vst.msk [vmem:[#allocation2 + $0x78] sm:$0xf0] %vm500, %v488
        %v502 = vld [vmem:[%s216] sm:$0xf]
        %v504 = vrot.slane %v502, 4
        %505 = vrot.lane.b32.xlu0 %v504, 91
        %v506 = vpop.permute.xlu0 %505
        %vm508 = vcmask 1048284
        %509 = vst.msk [vmem:[#allocation2 + $0x78] sm:$0xf0] %vm508, %v506
        %v510 = vld [vmem:[%s207] sm:$0xff]
        %v511 = vld [vmem:[%s207 + $0x8] sm:$0xff]
        %v514 = vcombine.high %v510, %v510
        %v515 = vcombine.high %v511, %v511
        %516 = vrot.lane.b32.xlu0 %v510, 90
        %v517 = vpop.permute.xlu0 %516
        %518 = vrot.lane.b32.xlu0 %v514, 90
        %v519 = vpop.permute.xlu0 %518
        %520 = vrot.lane.b32.xlu0 %v511, 90
        %v521 = vpop.permute.xlu0 %520
        %522 = vrot.lane.b32.xlu0 %v515, 90
        %v523 = vpop.permute.xlu0 %522
        %vm524 = vcmask 736256
        %v525 = vsel %vm524, %v517, %v519
        %v526 = vsel %vm524, %v519, %v521
        %v527 = vsel %vm524, %v521, %v523
        %532 = vst [vmem:[#allocation2 + $0x80] sm:$0xf] %v525
        %533 = vst [vmem:[#allocation2 + $0x88] sm:$0xf] %v526
        %534 = vst [vmem:[#allocation2 + $0x90] sm:$0xf] %v527
        %vm535 = vcmask 732160
        %536 = vst.msk [vmem:[#allocation2 + $0x98] sm:$0xf] %vm535, %v523
        %v537 = vld [vmem:[%s216] sm:$0xf]
        %539 = vrot.lane.b32.xlu0 %v537, 90
        %v540 = vpop.permute.xlu0 %539
        %vm542 = vcmask 1044176
        %543 = vst.msk [vmem:[#allocation2 + $0x98] sm:$0xf] %vm542, %v540
        %v544 = vld [vmem:[#allocation8] sm:$0xff]
        %v545 = vld [vmem:[#allocation2] sm:$0xff]
        %v546 = vld [vmem:[#allocation2 + $0x8] sm:$0xff]
        %v547 = vld [vmem:[#allocation2 + $0x10] sm:$0xff]
        %v548 = vld [vmem:[#allocation2 + $0x18] sm:$0xff]
        %v549 = vld [vmem:[#allocation2 + $0x20] sm:$0xff]
        %v550 = vld [vmem:[#allocation2 + $0x28] sm:$0xff]
        %v551 = vld [vmem:[#allocation2 + $0x30] sm:$0xff]
        %v552 = vld [vmem:[#allocation2 + $0x38] sm:$0xff]
        %v553 = vld [vmem:[#allocation2 + $0x40] sm:$0xff]
        %v554 = vld [vmem:[#allocation2 + $0x48] sm:$0xff]
        %v555 = vld [vmem:[#allocation2 + $0x50] sm:$0xff]
        %v556 = vld [vmem:[#allocation2 + $0x58] sm:$0xff]
        %v557 = vld [vmem:[#allocation2 + $0x60] sm:$0xff]
        %v558 = vld [vmem:[#allocation2 + $0x68] sm:$0xff]
        %v559 = vld [vmem:[#allocation2 + $0x70] sm:$0xff]
        %v560 = vld [vmem:[#allocation2 + $0x78] sm:$0xff]
        %v561 = vld [vmem:[#allocation2 + $0x80] sm:$0xf]
        %v562 = vld [vmem:[#allocation2 + $0x88] sm:$0xf]
        %v563 = vld [vmem:[#allocation2 + $0x90] sm:$0xf]
        %v564 = vld [vmem:[#allocation2 + $0x98] sm:$0xf]
        %vm565 = vcmask 293888
        %v567 = vsel %vm565, %v544, 0
        %vm569 = vcmask 1043456
        %v571 = vsel %vm569, %v561, 0
        %v574 = vsel %vm569, %v562, 0
        %v577 = vsel %vm569, %v563, 0
        %v580 = vsel %vm569, %v564, 0
        %582 = vmatprep.subr.mxu0 %v546
        %583 = vmatpush1.msra.mxu0 %v545
        %584 = vmatprep.subr.mxu0 %v550
        %585 = vmatpush1.msra.mxu0 %v549
        %586 = vmatprep.subr.mxu0 %v554
        %587 = vmatpush1.msra.mxu0 %v553
        %588 = vmatprep.subr.mxu0 %v558
        %589 = vmatpush1.msra.mxu0 %v557
        %590 = vmatprep.subr.mxu0 %v574
        %591 = vmatpush1.msra.mxu0 %v571
        %592 = vmatprep.subr.mxu0 0.0
        %593 = vmatpush1.msra.mxu0 0.0
        %594 = vmatprep.subr.mxu0 0.0
        %595 = vmatpush1.msra.mxu0 0.0
        %596 = vmatprep.subr.mxu0 0.0
        %597 = vmatpush1.msra.mxu0 0.0
        %598 = vmatprep.subr.mxu0 0.0
        %599 = vmatpush1.msra.mxu0 0.0
        %600 = vmatprep.subr.mxu0 0.0
        %601 = vmatpush1.msra.mxu0 0.0
        %602 = vmatprep.subr.mxu0 0.0
        %603 = vmatpush1.msra.mxu0 0.0
        %604 = vmatprep.subr.mxu0 0.0
        %605 = vmatpush1.msra.mxu0 0.0
        %606 = vmatprep.subr.mxu0 0.0
        %607 = vmatpush1.msra.mxu0 0.0
        %608 = vmatprep.subr.mxu0 0.0
        %609 = vmatpush1.msra.mxu0 0.0
        %610 = vmatprep.subr.mxu0 0.0
        %611 = vmatpush1.msra.mxu0 0.0
        %612 = vmatprep.subr.mxu0 0.0
        %613 = vmatpush1.msra.mxu0 0.0
        %614 = vmatprep.subr.mxu0 0.0
        %615 = vmatpush1.msra.mxu0 0.0
        %616 = vmatprep.subr.mxu0 0.0
        %617 = vmatpush1.msra.mxu0 0.0
        %618 = vmatprep.subr.mxu0 0.0
        %619 = vmatpush1.msra.mxu0 0.0
        %620 = vmatprep.subr.mxu0 0.0
        %621 = vmatpush1.msra.mxu0 0.0
        %622 = vmatprep.subr.mxu0 0.0
        %623 = vmatpush1.msra.mxu0 0.0
        %624 = vmatprep.subr.mxu0 0.0
        %625 = vmatpush1.msra.mxu0 0.0
        %626 = vmatprep.subr.mxu0 0.0
        %627 = vmatpush1.msra.mxu0 0.0
        %628 = vmatprep.subr.mxu0 0.0
        %629 = vmatpush1.msra.mxu0 0.0
        %630 = vmatprep.subr.mxu0 0.0
        %631 = vmatpush1.msra.mxu0 0.0
        %632 = vmatprep.subr.mxu0 0.0
        %633 = vmatpush1.msra.mxu0 0.0
        %634 = vmatprep.subr.mxu0 0.0
        %635 = vmatpush1.msra.mxu0 0.0
        %636 = vmatprep.subr.mxu0 0.0
        %637 = vmatpush1.msra.mxu0 0.0
        %638 = vmatprep.subr.mxu0 0.0
        %639 = vmatpush1.msra.mxu0 0.0
        %640 = vmatprep.subr.mxu0 0.0
        %641 = vmatpush1.msra.mxu0 0.0
        %642 = vmatprep.subr.mxu0 0.0
        %643 = vmatpush1.msra.mxu0 0.0
        %644 = vmatprep.subr.mxu0 0.0
        %645 = vmatpush1.msra.mxu0 0.0
        %646 = vmatprep.mubr.f32.mxu0 0.0
        %647 = vmatmul.mubr.f32.gmra.mrb[0].mxu0 %v567
        %v648 = vpop.f32.mrb[0].mxu0
        %v649 = vadd.f32 0.0, %v648
        %v650 = vpop.f32.mrb[0].mxu0
        %v651 = vadd.f32 0.0, %v650
        %652 = vdwg.mxu0
        %653 = vmatprep.subr.mxu0 %v548
        %654 = vmatpush1.msra.mxu0 %v547
        %655 = vmatprep.subr.mxu0 %v552
        %656 = vmatpush1.msra.mxu0 %v551
        %657 = vmatprep.subr.mxu0 %v556
        %658 = vmatpush1.msra.mxu0 %v555
        %659 = vmatprep.subr.mxu0 %v560
        %660 = vmatpush1.msra.mxu0 %v559
        %661 = vmatprep.subr.mxu0 %v580
        %662 = vmatpush1.msra.mxu0 %v577
        %663 = vmatprep.subr.mxu0 0.0
        %664 = vmatpush1.msra.mxu0 0.0
        %665 = vmatprep.subr.mxu0 0.0
        %666 = vmatpush1.msra.mxu0 0.0
        %667 = vmatprep.subr.mxu0 0.0
        %668 = vmatpush1.msra.mxu0 0.0
        %669 = vmatprep.subr.mxu0 0.0
        %670 = vmatpush1.msra.mxu0 0.0
        %671 = vmatprep.subr.mxu0 0.0
        %672 = vmatpush1.msra.mxu0 0.0
        %673 = vmatprep.subr.mxu0 0.0
        %674 = vmatpush1.msra.mxu0 0.0
        %675 = vmatprep.subr.mxu0 0.0
        %676 = vmatpush1.msra.mxu0 0.0
        %677 = vmatprep.subr.mxu0 0.0
        %678 = vmatpush1.msra.mxu0 0.0
        %679 = vmatprep.subr.mxu0 0.0
        %680 = vmatpush1.msra.mxu0 0.0
        %681 = vmatprep.subr.mxu0 0.0
        %682 = vmatpush1.msra.mxu0 0.0
        %683 = vmatprep.subr.mxu0 0.0
        %684 = vmatpush1.msra.mxu0 0.0
        %685 = vmatprep.subr.mxu0 0.0
        %686 = vmatpush1.msra.mxu0 0.0
        %687 = vmatprep.subr.mxu0 0.0
        %688 = vmatpush1.msra.mxu0 0.0
        %689 = vmatprep.subr.mxu0 0.0
        %690 = vmatpush1.msra.mxu0 0.0
        %691 = vmatprep.subr.mxu0 0.0
        %692 = vmatpush1.msra.mxu0 0.0
        %693 = vmatprep.subr.mxu0 0.0
        %694 = vmatpush1.msra.mxu0 0.0
        %695 = vmatprep.subr.mxu0 0.0
        %696 = vmatpush1.msra.mxu0 0.0
        %697 = vmatprep.subr.mxu0 0.0
        %698 = vmatpush1.msra.mxu0 0.0
        %699 = vmatprep.subr.mxu0 0.0
        %700 = vmatpush1.msra.mxu0 0.0
        %701 = vmatprep.subr.mxu0 0.0
        %702 = vmatpush1.msra.mxu0 0.0
        %703 = vmatprep.subr.mxu0 0.0
        %704 = vmatpush1.msra.mxu0 0.0
        %705 = vmatprep.subr.mxu0 0.0
        %706 = vmatpush1.msra.mxu0 0.0
        %707 = vmatprep.subr.mxu0 0.0
        %708 = vmatpush1.msra.mxu0 0.0
        %709 = vmatprep.subr.mxu0 0.0
        %710 = vmatpush1.msra.mxu0 0.0
        %711 = vmatprep.subr.mxu0 0.0
        %712 = vmatpush1.msra.mxu0 0.0
        %713 = vmatprep.subr.mxu0 0.0
        %714 = vmatpush1.msra.mxu0 0.0
        %715 = vmatprep.subr.mxu0 0.0
        %716 = vmatpush1.msra.mxu0 0.0
        %717 = vmatprep.mubr.f32.mxu0 0.0
        %718 = vmatmul.mubr.f32.gmra.mrb[0].mxu0 %v567
        %v719 = vpop.f32.mrb[0].mxu0
        %v720 = vadd.f32 0.0, %v719
        %v721 = vpop.f32.mrb[0].mxu0
        %v722 = vadd.f32 0.0, %v721
        %723 = vdwg.mxu0
        %v724 = vmax.f32 %v649, 0.0
        %v725 = vmax.f32 %v651, 0.0
        %v726 = vmax.f32 %v720, 0.0
        %v727 = vmax.f32 %v722, 0.0
        %728 = vst [vmem:[%s247] sm:$0xff] %v724
        %729 = vst [vmem:[%s247 + $0x8] sm:$0xff] %v725
        %730 = vst [vmem:[%s247 + $0x10] sm:$0xff] %v726
        %731 = vst [vmem:[%s247 + $0x18] sm:$0xff] %v727
        %s732 = sand.u32 %s108, 1
        %s733 = scalar_lea.sflag [#allocation5], %s732
        %s734 = sand.u32 %s108, 1
        %s735 = smul.addr %s734, 32
        %s736 = scalar_lea.vmem [#allocation9], %s735
        // Predicated region
        $region45: #{tpu_custom_call.1} parent=31 // pred_check
          %p737 = pneg %p118
        $region46: #{tpu_custom_call.1} parent=31 // pred_check_branch
          %739 = sbr.rel (%p737) target = $region48
        $region47: #{tpu_custom_call.1} parent=31 // pred_region
          %s740 = smul.u32 4, %s23
          %s742 = ssub.s32 512, 512
          %743 = vsyncadd %s733, %s742
          %s744 = smul.addr %s740, 128
          %s745 = scalar_lea.hbm %s3, %s744
          %s747 = sshll.u32 %s736, 4
          %s748 = int_to_ptr.vmem [resolvable:$true] %s747
          %750 = dma.vmem_to_hbm [thread:$0]  %s748, 512, %s745, %s733
        $region48: #{tpu_custom_call.1} parent=31 // pred_fallthru
          _
      $region32: #{tpu_custom_call.1} parent=5 // pred_fallthru
        _
      %p751 = scmp.le.s32.totalorder 2, %s18
      // Predicated region
      $region49: #{tpu_custom_call.1} parent=5 // pred_check
        %p752 = pneg %p751
      $region50: #{tpu_custom_call.1} parent=5 // pred_check_branch
        %754 = sbr.rel (%p752) target = $region52
      $region51: #{tpu_custom_call.1} parent=5 // pred_region
        %s755 = ssub.s32 %s18, 2
        // Predicated region
        $region53: #{tpu_custom_call.1} parent=51 // pred_check
          %p756 = pneg %p124
        $region54: #{tpu_custom_call.1} parent=51 // pred_check_branch
          %758 = sbr.rel (%p756) target = $region56
        $region55: #{tpu_custom_call.1} parent=51 // pred_region
          %s759 = sand.u32 %s109, 1
          %s760 = scalar_lea.sflag [#allocation5], %s759
          %s761 = sand.u32 %s109, 1
          %s762 = smul.addr %s761, 32
          %s763 = scalar_lea.vmem [#allocation9], %s762
          %764 = dma.done %s760, 512
        $region56: #{tpu_custom_call.1} parent=51 // pred_fallthru
          _
      $region52: #{tpu_custom_call.1} parent=5 // pred_fallthru
        _
    $region6: #{tpu_custom_call.1} parent=1 // loop_footer
      %s22 = sadd.s32 1, %s18
    $region7: #{tpu_custom_call.1} parent=1 // loop_footer_branch
      %17 = sbr.rel target = $region3
    $region8: #{tpu_custom_call.1} parent=1 // loop_exit
      _
    %765 = vsyncpa [#allocation4], 1
    %s766 = scalar_lea.sflag [#allocation4], 1
    %767 = vsyncpa %s766, 1
    %768 = vsyncpa [#allocation7], 1
    %s769 = scalar_lea.sflag [#allocation7], 1
    %770 = vsyncpa %s769, 1
    %771 = vsyncpa [#allocation5], 1
    %s772 = scalar_lea.sflag [#allocation5], 1
    %773 = vsyncpa %s772, 1

</llo_original>
